<compile_context>
chip_gen: v5e
topology: v5e:2x2
jax: 0.10.0
libtpu: 0.0.40
codegen_flags: <defaults>
</compile_context>

<pallas_src>
import jax
import jax.numpy as jnp
from jax.experimental import pallas as pl
from jax.experimental.pallas import tpu as pltpu

NEG_FILL = -1000000000000.0   # exact fill value used by masked_fill_ in torch
LEAKY_SLOPE = 0.2             # nn.LeakyReLU(negative_slope=0.2)


def _gat_kernel(h_ref, adj_ref, w_ref, a_ref, out_ref):
  """One (batch, channel, head) tile of multi-head graph attention.

  h_ref   : (1, 1, N, f_in)      node features for this (b, c)
  adj_ref : (1, N, N)            adjacency for this b (shared over c, head)
  w_ref   : (1, 1, f_in, f_out)  projection for this (c, head)
  a_ref   : (1, 1, 2, f_out)     packed [a_src ; a_dst] for this (c, head)
  out_ref : (1, 1, 1, N, f_out)
  """
  h = h_ref[0, 0]                       # (N, f_in)
  w = w_ref[0, 0]                       # (f_in, f_out)
  a_src = a_ref[0, 0, 0:1, :]           # (1, f_out)
  a_dst = a_ref[0, 0, 1:2, :]           # (1, f_out)
  adj = adj_ref[0]                      # (N, N)

  # h' = h @ W  -> MXU, f32 accumulate.
  h_prime = jnp.dot(h, w, preferred_element_type=jnp.float32)      # (N, f_out)
  t = jnp.tanh(h_prime)                                            # EUP

  # attn_src[i] = sum_k tanh(h')[i,k] * a_src[k]   (column, per-node i)
  # Tiny K=f_out contraction: keep it on the VPU + lane reduce, not the MXU.
  src = jnp.sum(t * a_src, axis=-1, keepdims=True)                 # (N, 1)

  # attn_dst[j] laid out along lanes directly via the dot(a, t.T) pattern
  # (avoids a separate sublane->lane relayout of a (N,1) column).
  dst = jnp.dot(a_dst, t.T, preferred_element_type=jnp.float32)    # (1, N)

  # attn[i, j] = src[i] + dst[j], then LeakyReLU(0.2).
  logits = src + dst                                               # (N, N)
  attn = jnp.where(logits >= 0, logits, LEAKY_SLOPE * logits)

  # Mask where (adj + I) == 0 with -1e12 (exact module semantics).
  n = adj.shape[0]
  row = jax.lax.broadcasted_iota(jnp.int32, (n, n), 0)
  col = jax.lax.broadcasted_iota(jnp.int32, (n, n), 1)
  eye = (row == col).astype(adj.dtype)
  attn = jnp.where((adj + eye) == 0, NEG_FILL, attn)

  # Softmax over neighbours j (the 128-lane axis).
  m = jnp.max(attn, axis=-1, keepdims=True)
  e = jnp.exp(attn - m)
  p = e / jnp.sum(e, axis=-1, keepdims=True)

  # TODO(synk): self.dropout(attn_all) skipped (eval-mode forward).

  # output = attn @ h'  -> MXU.
  out = jnp.dot(p, h_prime, preferred_element_type=jnp.float32)    # (N, f_out)
  out_ref[0, 0, 0] = out.astype(out_ref.dtype)


def _pad_tile_bytes(rows, cols, itemsize=4):
  """f32 VMEM footprint of a 2-D tile after (8, 128) padding."""
  r = -(-max(rows, 1) // 8) * 8
  c = -(-max(cols, 1) // 128) * 128
  return r * c * itemsize


@jax.jit
def batch_mhga_pallas(h, adj, w, a_src, a_dst):
  """h: (B, C, N, f_in); adj: (B, N, N); w: (C, H, f_in, f_out);
  a_src/a_dst: (C, H, f_out, 1).  Returns (B, C, H, N, f_out)."""
  B, C, N, f_in = h.shape
  _, H, _, f_out = w.shape

  # Pack a_src / a_dst into one (C, H, 2, f_out) tensor (drops the trailing
  # size-1 dim and halves per-step weight DMAs).
  a_packed = jnp.stack([a_src[..., 0], a_dst[..., 0]], axis=2)

  # VMEM budget: ~2x double-buffered blocks + in-kernel intermediates, with
  # headroom; clamp well under v7x's 64 MiB physical VMEM.
  block_bytes = (_pad_tile_bytes(N, f_in) + _pad_tile_bytes(N, N)
                 + _pad_tile_bytes(f_in, f_out) + _pad_tile_bytes(2, f_out)
                 + _pad_tile_bytes(N, f_out))
  interm_bytes = 4 * _pad_tile_bytes(N, N) + 4 * _pad_tile_bytes(N, f_out)
  vmem_limit = int(min(96 * 2**20,
                       max(16 * 2**20, 4 * block_bytes + interm_bytes)))

  return pl.pallas_call(
      _gat_kernel,
      out_shape=jax.ShapeDtypeStruct((B, C, H, N, f_out), h.dtype),
      grid=(B, C, H),
      in_specs=[
          pl.BlockSpec((1, 1, N, f_in), lambda b, c, hd: (b, c, 0, 0)),
          pl.BlockSpec((1, N, N), lambda b, c, hd: (b, 0, 0)),
          pl.BlockSpec((1, 1, f_in, f_out), lambda b, c, hd: (c, hd, 0, 0)),
          pl.BlockSpec((1, 1, 2, f_out), lambda b, c, hd: (c, hd, 0, 0)),
      ],
      out_specs=pl.BlockSpec((1, 1, 1, N, f_out),
                             lambda b, c, hd: (b, c, hd, 0, 0)),
      compiler_params=pltpu.CompilerParams(
          dimension_semantics=("parallel", "parallel", "parallel"),
          vmem_limit_bytes=vmem_limit),
  )(h, adj, w, a_packed)


def batch_mhga_ref(h, adj, w, a_src, a_dst):
  """Pure-JAX reference mirroring the PyTorch forward (eval mode)."""
  hi = jax.lax.Precision.HIGHEST
  hp = jnp.einsum('bcnf,chfo->bchno', h, w, precision=hi)           # (B,C,H,N,Fo)
  t = jnp.tanh(hp)
  src = jnp.einsum('bchno,cho->bchn', t, a_src[..., 0], precision=hi)
  dst = jnp.einsum('bchno,cho->bchn', t, a_dst[..., 0], precision=hi)
  attn = src[..., :, None] + dst[..., None, :]                      # (B,C,H,N,N)
  attn = jnp.where(attn >= 0, attn, LEAKY_SLOPE * attn)
  n = adj.shape[-1]
  adjm = adj + jnp.eye(n, dtype=adj.dtype)[None]
  mask = (adjm == 0)[:, None, None, :, :]
  attn = jnp.where(mask, NEG_FILL, attn)
  p = jax.nn.softmax(attn, axis=-1)
  return jnp.einsum('bchij,bchjo->bchio', p, hp, precision=hi)


def _xavier_uniform(key, shape):
  # PyTorch xavier_uniform_ fan computation for an nd tensor:
  # fan_in = shape[1] * prod(shape[2:]); fan_out = shape[0] * prod(shape[2:]).
  receptive = 1
  for s in shape[2:]:
    receptive *= s
  fan_in = shape[1] * receptive
  fan_out = shape[0] * receptive
  bound = (6.0 / (fan_in + fan_out)) ** 0.5
  return jax.random.uniform(key, shape, jnp.float32, -bound, bound)


if __name__ == "__main__":
  B, C, H, N, F_IN, F_OUT = 2, 4, 2, 16, 16, 16

  key = jax.random.PRNGKey(0)
  k_h, k_adj, k_w, k_src, k_dst = jax.random.split(key, 5)

  h = jax.random.normal(k_h, (B, C, N, F_IN), jnp.float32)
  adj = (jax.random.uniform(k_adj, (B, N, N)) > 0.5).astype(jnp.float32)
  w = _xavier_uniform(k_w, (C, H, F_IN, F_OUT))       # self.w
  a_src = _xavier_uniform(k_src, (C, H, F_OUT, 1))    # self.a_src
  a_dst = _xavier_uniform(k_dst, (C, H, F_OUT, 1))    # self.a_dst

  out = batch_mhga_pallas(h, adj, w, a_src, a_dst)
  out = jax.block_until_ready(out)

  ref = batch_mhga_ref(h, adj, w, a_src, a_dst)
  assert out.shape == (B, C, H, N, F_OUT)
  max_err = jnp.max(jnp.abs(out - ref))
  assert jnp.allclose(out, ref, atol=2e-3, rtol=2e-3), \
      f"max abs err {max_err}"

  print("KERNEL_OK")
</pallas_src>

<mosaic_0001>
module attributes {stable_mosaic.version = 11 : i64} {
  func.func @_gat_kernel(%arg0: i32, %arg1: i32, %arg2: i32, %arg3: memref<1x1x16x16xf32, #tpu.memory_space<vmem>>, %arg4: memref<1x16x16xf32, #tpu.memory_space<vmem>>, %arg5: memref<1x1x16x16xf32, #tpu.memory_space<vmem>>, %arg6: memref<1x1x2x16xf32, #tpu.memory_space<vmem>>, %arg7: memref<1x1x1x16x16xf32, #tpu.memory_space<vmem>>) attributes {dimension_semantics = [#tpu.dimension_semantics<parallel>, #tpu.dimension_semantics<parallel>, #tpu.dimension_semantics<parallel>], iteration_bounds = array<i64: 2, 4, 2>, scalar_prefetch = 0 : i64, scratch_operands = 0 : i64, tpu.core_type = #tpu.core_type<tc>, window_params = [{transform_indices = @transform_0, window_bounds = array<i64: 1, 1, 16, 16>}, {transform_indices = @transform_1, window_bounds = array<i64: 1, 16, 16>}, {transform_indices = @transform_2, window_bounds = array<i64: 1, 1, 16, 16>}, {transform_indices = @transform_3, window_bounds = array<i64: 1, 1, 2, 16>}, {transform_indices = @transform_4, window_bounds = array<i64: 1, 1, 1, 16, 16>}]} {
    %c0 = arith.constant 0 : index
    %c0_0 = arith.constant 0 : index
    %c0_1 = arith.constant 0 : index
    %c0_2 = arith.constant 0 : index
    %0 = vector.load %arg3[%c0, %c0_0, %c0_1, %c0_2] : memref<1x1x16x16xf32, #tpu.memory_space<vmem>>, vector<1x1x16x16xf32>
    %1 = vector.shape_cast %0 : vector<1x1x16x16xf32> to vector<16x16xf32>
    %c0_3 = arith.constant 0 : index
    %c0_4 = arith.constant 0 : index
    %c0_5 = arith.constant 0 : index
    %c0_6 = arith.constant 0 : index
    %2 = vector.load %arg5[%c0_3, %c0_4, %c0_5, %c0_6] : memref<1x1x16x16xf32, #tpu.memory_space<vmem>>, vector<1x1x16x16xf32>
    %3 = vector.shape_cast %2 : vector<1x1x16x16xf32> to vector<16x16xf32>
    %c0_7 = arith.constant 0 : index
    %c0_8 = arith.constant 0 : index
    %c0_9 = arith.constant 0 : index
    %c0_10 = arith.constant 0 : index
    %4 = vector.load %arg6[%c0_7, %c0_8, %c0_9, %c0_10] : memref<1x1x2x16xf32, #tpu.memory_space<vmem>>, vector<1x1x1x16xf32>
    %5 = vector.shape_cast %4 : vector<1x1x1x16xf32> to vector<1x16xf32>
    %c0_11 = arith.constant 0 : index
    %c0_12 = arith.constant 0 : index
    %c1 = arith.constant 1 : index
    %c0_13 = arith.constant 0 : index
    %6 = vector.load %arg6[%c0_11, %c0_12, %c1, %c0_13] : memref<1x1x2x16xf32, #tpu.memory_space<vmem>>, vector<1x1x1x16xf32>
    %7 = vector.shape_cast %6 : vector<1x1x1x16xf32> to vector<1x16xf32>
    %c0_14 = arith.constant 0 : index
    %c0_15 = arith.constant 0 : index
    %c0_16 = arith.constant 0 : index
    %8 = vector.load %arg4[%c0_14, %c0_15, %c0_16] : memref<1x16x16xf32, #tpu.memory_space<vmem>>, vector<1x16x16xf32>
    %9 = vector.shape_cast %8 : vector<1x16x16xf32> to vector<16x16xf32>
    %cst = arith.constant dense<0.000000e+00> : vector<16x16xf32>
    %10 = tpu.matmul %1, %3, %cst {dimension_numbers = #tpu.dot_dimension_numbers<[1], [0], [0], [1], [0, 0, 1, 1], [], []>} : vector<16x16xf32>, vector<16x16xf32>, vector<16x16xf32> -> vector<16x16xf32>
    %11 = math.tanh %10 : vector<16x16xf32>
    %12 = vector.broadcast %5 : vector<1x16xf32> to vector<16x16xf32>
    %13 = arith.mulf %11, %12 : vector<16x16xf32>
    %cst_17 = arith.constant dense<0.000000e+00> : vector<16xf32>
    %14 = vector.multi_reduction <add>, %13, %cst_17 [1] : vector<16x16xf32> to vector<16xf32>
    %15 = vector.shape_cast %14 : vector<16xf32> to vector<16x1xf32>
    %16 = tpu.transpose %11, [1, 0] : vector<16x16xf32> -> vector<16x16xf32>
    %cst_18 = arith.constant dense<0.000000e+00> : vector<1x16xf32>
    %17 = tpu.matmul %7, %16, %cst_18 {dimension_numbers = #tpu.dot_dimension_numbers<[1], [0], [0], [1], [0, 0, 1, 1], [], []>} : vector<1x16xf32>, vector<16x16xf32>, vector<1x16xf32> -> vector<1x16xf32>
    %18 = vector.broadcast %15 : vector<16x1xf32> to vector<16x16xf32>
    %19 = vector.broadcast %17 : vector<1x16xf32> to vector<16x16xf32>
    %20 = arith.addf %18, %19 : vector<16x16xf32>
    %cst_19 = arith.constant 0.000000e+00 : f32
    %21 = vector.broadcast %cst_19 : f32 to vector<16x16xf32>
    %22 = arith.cmpf oge, %20, %21 : vector<16x16xf32>
    %cst_20 = arith.constant 2.000000e-01 : f32
    %23 = vector.broadcast %cst_20 : f32 to vector<16x16xf32>
    %24 = arith.mulf %23, %20 : vector<16x16xf32>
    %25 = arith.select %22, %20, %24 : vector<16x16xi1>, vector<16x16xf32>
    %26 = tpu.iota {dimensions = array<i32: 0>} : vector<16x16xi32>
    %27 = tpu.iota {dimensions = array<i32: 1>} : vector<16x16xi32>
    %28 = arith.cmpi eq, %26, %27 : vector<16x16xi32>
    %29 = arith.extui %28 : vector<16x16xi1> to vector<16x16xi32>
    %30 = arith.sitofp %29 : vector<16x16xi32> to vector<16x16xf32>
    %31 = arith.addf %9, %30 : vector<16x16xf32>
    %cst_21 = arith.constant 0.000000e+00 : f32
    %32 = vector.broadcast %cst_21 : f32 to vector<16x16xf32>
    %33 = arith.cmpf oeq, %31, %32 : vector<16x16xf32>
    %cst_22 = arith.constant -9.99999995E+11 : f32
    %34 = vector.broadcast %cst_22 : f32 to vector<16x16xf32>
    %35 = arith.select %33, %34, %25 : vector<16x16xi1>, vector<16x16xf32>
    %cst_23 = arith.constant dense<0xFF800000> : vector<16xf32>
    %36 = vector.multi_reduction <maximumf>, %35, %cst_23 [1] : vector<16x16xf32> to vector<16xf32>
    %37 = vector.shape_cast %36 : vector<16xf32> to vector<16x1xf32>
    %38 = vector.broadcast %37 : vector<16x1xf32> to vector<16x16xf32>
    %39 = arith.subf %35, %38 : vector<16x16xf32>
    %40 = math.exp %39 : vector<16x16xf32>
    %cst_24 = arith.constant dense<0.000000e+00> : vector<16xf32>
    %41 = vector.multi_reduction <add>, %40, %cst_24 [1] : vector<16x16xf32> to vector<16xf32>
    %42 = vector.shape_cast %41 : vector<16xf32> to vector<16x1xf32>
    %43 = vector.broadcast %42 : vector<16x1xf32> to vector<16x16xf32>
    %44 = arith.divf %40, %43 : vector<16x16xf32>
    %cst_25 = arith.constant dense<0.000000e+00> : vector<16x16xf32>
    %45 = tpu.matmul %44, %10, %cst_25 {dimension_numbers = #tpu.dot_dimension_numbers<[1], [0], [0], [1], [0, 0, 1, 1], [], []>} : vector<16x16xf32>, vector<16x16xf32>, vector<16x16xf32> -> vector<16x16xf32>
    %c0_26 = arith.constant 0 : index
    %c0_27 = arith.constant 0 : index
    %c0_28 = arith.constant 0 : index
    %c0_29 = arith.constant 0 : index
    %c0_30 = arith.constant 0 : index
    %46 = vector.load %arg7[%c0_26, %c0_27, %c0_28, %c0_29, %c0_30] : memref<1x1x1x16x16xf32, #tpu.memory_space<vmem>>, vector<1x1x1x16x16xf32>
    %47 = vector.shape_cast %46 : vector<1x1x1x16x16xf32> to vector<16x16xf32>
    %48 = vector.shape_cast %45 : vector<16x16xf32> to vector<1x1x1x16x16xf32>
    tpu.vector_store %arg7[%c0_26, %c0_27, %c0_28, %c0_29, %c0_30], %48 {strides = array<i32>} : memref<1x1x1x16x16xf32, #tpu.memory_space<vmem>>, vector<1x1x1x16x16xf32>,
    return
  }
  func.func @transform_0(%arg0: i32, %arg1: i32, %arg2: i32) -> (i32, i32, i32, i32) {
    %c0_i32 = arith.constant 0 : i32
    %c0_i32_0 = arith.constant 0 : i32
    %c0_i32_1 = arith.constant 0 : i32
    return %arg0, %arg1, %c0_i32, %c0_i32_0 : i32, i32, i32, i32
  }
  func.func @transform_1(%arg0: i32, %arg1: i32, %arg2: i32) -> (i32, i32, i32) {
    %c0_i32 = arith.constant 0 : i32
    %c0_i32_0 = arith.constant 0 : i32
    %c0_i32_1 = arith.constant 0 : i32
    return %arg0, %c0_i32, %c0_i32_0 : i32, i32, i32
  }
  func.func @transform_2(%arg0: i32, %arg1: i32, %arg2: i32) -> (i32, i32, i32, i32) {
    %c0_i32 = arith.constant 0 : i32
    %c0_i32_0 = arith.constant 0 : i32
    %c0_i32_1 = arith.constant 0 : i32
    return %arg1, %arg2, %c0_i32, %c0_i32_0 : i32, i32, i32, i32
  }
  func.func @transform_3(%arg0: i32, %arg1: i32, %arg2: i32) -> (i32, i32, i32, i32) {
    %c0_i32 = arith.constant 0 : i32
    %c0_i32_0 = arith.constant 0 : i32
    %c0_i32_1 = arith.constant 0 : i32
    return %arg1, %arg2, %c0_i32, %c0_i32_0 : i32, i32, i32, i32
  }
  func.func @transform_4(%arg0: i32, %arg1: i32, %arg2: i32) -> (i32, i32, i32, i32, i32) {
    %c0_i32 = arith.constant 0 : i32
    %c0_i32_0 = arith.constant 0 : i32
    %c0_i32_1 = arith.constant 0 : i32
    return %arg0, %arg1, %arg2, %c0_i32, %c0_i32_0 : i32, i32, i32, i32, i32
  }
}

</mosaic_0001>

<llo_original>
// kernel: batch_mhga_pallas.1
$region0: #{batch_mhga_pallas.1}
  #allocation0 [shape = 'u32[]', space=smem, size = 0x4, offset = 0x4, fixed_abs, tag = 'smem constant byte address 0x4 - core index']
  #allocation1 [shape = 'u32[72,128]{1,0:T(1,128)}', space=vmem, size = 0x9000, scoped, tag = 'internal scratch']
  %s0 = inlined_call_operand.hbm [shape: f32[2,4,16,16], index: 0, kind: input, shape index: {}]
  %s1 = inlined_call_operand.vmem [shape: f32[2,16,16], index: 1, kind: input, shape index: {}]
  %s2 = inlined_call_operand.hbm [shape: f32[4,2,16,16], index: 2, kind: input, shape index: {}]
  %s3 = inlined_call_operand.vmem [shape: f32[4,2,2,16], index: 3, kind: input, shape index: {}]
  %s4 = inlined_call_operand.hbm [shape: f32[2,4,2,16,16], index: 4, kind: output, shape index: {}]
  %s5 = sld [smem:[#allocation0]]
  $region57: #{batch_mhga_pallas.1} parent=0
    _
  %s7 = ssub.s32 1, %s5
  %s8 = scalar_select 0, %s7, %s5
  $region1: #{batch_mhga_pallas.1} parent=0
    #allocation2 [shape = 'u8[16384]{0}', space=vmem, size = 0x4000, scoped, tag = 'input window, operand 0']
    #allocation3 [shape = 's32[2]{0}', space=sflag, size = 0x8, scoped, tag = 'scoped memory for batch_mhga_pallas.1']
    #allocation4 [shape = 's32[2]{0}', space=sflag, size = 0x8, scoped, tag = 'scoped memory for batch_mhga_pallas.1']
    #allocation5 [shape = 'u8[16384]{0}', space=vmem, size = 0x4000, scoped, tag = 'input window, operand 2']
    #allocation6 [shape = 's32[2]{0}', space=sflag, size = 0x8, scoped, tag = 'scoped memory for batch_mhga_pallas.1']
    #allocation7 [shape = 'u8[16384]{0}', space=vmem, size = 0x4000, scoped, tag = 'output window, operand 0']
    %9 = vsyncpa [#allocation3], 0
    %s10 = scalar_lea.sflag [#allocation3], 1
    %11 = vsyncpa %s10, 0
    %12 = vsyncpa [#allocation6], 0
    %s13 = scalar_lea.sflag [#allocation6], 1
    %14 = vsyncpa %s13, 0
    %15 = vsyncpa [#allocation4], 0
    %s16 = scalar_lea.sflag [#allocation4], 1
    %17 = vsyncpa %s16, 0
    loop: start=0, step=1, limit=18
    $region2: #{batch_mhga_pallas.1} parent=1 // loop_pre_header
      _
    $region3: #{batch_mhga_pallas.1} parent=1 // loop_header
      %s19 = sphi 0, %s23
      %p20 = scmp.ge.s32.totalorder %s19, 18
      %s26 = sphi 0, %s45
      %s27 = sphi 0, %s41
      %s28 = sphi 0, %s37
      %s29 = sphi 0, %s26
      %s30 = sphi 0, %s27
      %s31 = sphi 0, %s28
      %s32 = sphi 0, %s29
      %s33 = sphi 0, %s30
      %s34 = sphi 0, %s31
      %s50 = sphi 0, %s52
      %s53 = sphi 0, %s50
      %s54 = sphi 0, %s53
      %s70 = sphi 0, %s54
      %s76 = sphi 0, %s78
      %s79 = sphi 0, %s76
      %s80 = sphi 0, %s79
      %s96 = sphi 0, %s80
      %s104 = sphi 0, %s106
      %s107 = sphi 0, %s104
      %s108 = sphi 0, %s107
      %s124 = sphi 0, %s108
      %s132 = sphi 0, %s134
      %s135 = sphi 0, %s132
      %s136 = sphi 0, %s135
      %s152 = sphi 0, %s136
      %s162 = sphi 0, %s164
      %s165 = sphi 0, %s162
      %s166 = sphi 0, %s165
      %s182 = sphi 0, %s166
    $region4: #{batch_mhga_pallas.1} parent=1 // loop_header_branch
      %22 = sbr.rel (%p20) target = $region8
    $region5: #{batch_mhga_pallas.1} parent=1 // loop_body
      %s24 = ssub.s32 %s19, 1
      %s25 = ssub.s32 %s19, 2
      %s35 = sadd.s32 1, %s28
      %p36 = scmp.ge.s32.totalorder %s35, 2
      %s37 = scalar_select %p36, 0, %s35
      %s38 = sadd.s32 1, %s27
      %s39 = scalar_select %p36, %s38, %s27
      %p40 = scmp.ge.s32.totalorder %s39, 4
      %s41 = scalar_select %p40, 0, %s39
      %s42 = sadd.s32 1, %s26
      %s43 = scalar_select %p40, %s42, %s26
      %p44 = scmp.ge.s32.totalorder %s43, 2
      %s45 = scalar_select %p44, 0, %s43
      %s46 = ssub.s32 %s26, %s45
      %s47 = ssub.s32 %s27, %s41
      %s48 = sor.u32 %s46, %s47
      %p49 = scmp.eq.s32.totalorder %s48, 0
      %s51 = sadd.s32 %s50, 1
      %s52 = scalar_select %p49, %s50, %s51
      %p55 = pneg %p49
      %p56 = scmp.eq.s32.totalorder %s19, 15
      %p57 = por %p55, %p56
      %p58 = scmp.ne.s32.totalorder %s50, %s53
      %p59 = scmp.eq.s32.totalorder %s19, 0
      %p60 = por %p58, %p59
      %p61 = scmp.ne.s32.totalorder %s50, %s53
      %p62 = scmp.eq.s32.totalorder %s24, 15
      %p63 = por %p61, %p62
      %p64 = scmp.ne.s32.totalorder %s53, %s54
      %p65 = scmp.eq.s32.totalorder %s24, 0
      %p66 = por %p64, %p65
      %p67 = scmp.ne.s32.totalorder %s53, %s54
      %p68 = scmp.eq.s32.totalorder %s25, 15
      %p69 = por %p67, %p68
      %p71 = scmp.ne.s32.totalorder %s54, %s70
      %p72 = scmp.eq.s32.totalorder %s25, 0
      %p73 = por %p71, %p72
      %s74 = ssub.s32 %s26, %s45
      %p75 = scmp.eq.s32.totalorder %s74, 0
      %s77 = sadd.s32 %s76, 1
      %s78 = scalar_select %p75, %s76, %s77
      %p81 = pneg %p75
      %p82 = scmp.eq.s32.totalorder %s19, 15
      %p83 = por %p81, %p82
      %p84 = scmp.ne.s32.totalorder %s76, %s79
      %p85 = scmp.eq.s32.totalorder %s19, 0
      %p86 = por %p84, %p85
      %p87 = scmp.ne.s32.totalorder %s76, %s79
      %p88 = scmp.eq.s32.totalorder %s24, 15
      %p89 = por %p87, %p88
      %p90 = scmp.ne.s32.totalorder %s79, %s80
      %p91 = scmp.eq.s32.totalorder %s24, 0
      %p92 = por %p90, %p91
      %p93 = scmp.ne.s32.totalorder %s79, %s80
      %p94 = scmp.eq.s32.totalorder %s25, 15
      %p95 = por %p93, %p94
      %p97 = scmp.ne.s32.totalorder %s80, %s96
      %p98 = scmp.eq.s32.totalorder %s25, 0
      %p99 = por %p97, %p98
      %s100 = ssub.s32 %s27, %s41
      %s101 = ssub.s32 %s28, %s37
      %s102 = sor.u32 %s100, %s101
      %p103 = scmp.eq.s32.totalorder %s102, 0
      %s105 = sadd.s32 %s104, 1
      %s106 = scalar_select %p103, %s104, %s105
      %p109 = pneg %p103
      %p110 = scmp.eq.s32.totalorder %s19, 15
      %p111 = por %p109, %p110
      %p112 = scmp.ne.s32.totalorder %s104, %s107
      %p113 = scmp.eq.s32.totalorder %s19, 0
      %p114 = por %p112, %p113
      %p115 = scmp.ne.s32.totalorder %s104, %s107
      %p116 = scmp.eq.s32.totalorder %s24, 15
      %p117 = por %p115, %p116
      %p118 = scmp.ne.s32.totalorder %s107, %s108
      %p119 = scmp.eq.s32.totalorder %s24, 0
      %p120 = por %p118, %p119
      %p121 = scmp.ne.s32.totalorder %s107, %s108
      %p122 = scmp.eq.s32.totalorder %s25, 15
      %p123 = por %p121, %p122
      %p125 = scmp.ne.s32.totalorder %s108, %s124
      %p126 = scmp.eq.s32.totalorder %s25, 0
      %p127 = por %p125, %p126
      %s128 = ssub.s32 %s27, %s41
      %s129 = ssub.s32 %s28, %s37
      %s130 = sor.u32 %s128, %s129
      %p131 = scmp.eq.s32.totalorder %s130, 0
      %s133 = sadd.s32 %s132, 1
      %s134 = scalar_select %p131, %s132, %s133
      %p137 = pneg %p131
      %p138 = scmp.eq.s32.totalorder %s19, 15
      %p139 = por %p137, %p138
      %p140 = scmp.ne.s32.totalorder %s132, %s135
      %p141 = scmp.eq.s32.totalorder %s19, 0
      %p142 = por %p140, %p141
      %p143 = scmp.ne.s32.totalorder %s132, %s135
      %p144 = scmp.eq.s32.totalorder %s24, 15
      %p145 = por %p143, %p144
      %p146 = scmp.ne.s32.totalorder %s135, %s136
      %p147 = scmp.eq.s32.totalorder %s24, 0
      %p148 = por %p146, %p147
      %p149 = scmp.ne.s32.totalorder %s135, %s136
      %p150 = scmp.eq.s32.totalorder %s25, 15
      %p151 = por %p149, %p150
      %p153 = scmp.ne.s32.totalorder %s136, %s152
      %p154 = scmp.eq.s32.totalorder %s25, 0
      %p155 = por %p153, %p154
      %s156 = ssub.s32 %s26, %s45
      %s157 = ssub.s32 %s27, %s41
      %s158 = sor.u32 %s156, %s157
      %s159 = ssub.s32 %s28, %s37
      %s160 = sor.u32 %s158, %s159
      %p161 = scmp.eq.s32.totalorder %s160, 0
      %s163 = sadd.s32 %s162, 1
      %s164 = scalar_select %p161, %s162, %s163
      %p167 = pneg %p161
      %p168 = scmp.eq.s32.totalorder %s19, 15
      %p169 = por %p167, %p168
      %p170 = scmp.ne.s32.totalorder %s162, %s165
      %p171 = scmp.eq.s32.totalorder %s19, 0
      %p172 = por %p170, %p171
      %p173 = scmp.ne.s32.totalorder %s162, %s165
      %p174 = scmp.eq.s32.totalorder %s24, 15
      %p175 = por %p173, %p174
      %p176 = scmp.ne.s32.totalorder %s165, %s166
      %p177 = scmp.eq.s32.totalorder %s24, 0
      %p178 = por %p176, %p177
      %p179 = scmp.ne.s32.totalorder %s165, %s166
      %p180 = scmp.eq.s32.totalorder %s25, 15
      %p181 = por %p179, %p180
      %p183 = scmp.ne.s32.totalorder %s166, %s182
      %p184 = scmp.eq.s32.totalorder %s25, 0
      %p185 = por %p183, %p184
      %p186 = scmp.le.s32.totalorder 1, %s19
      %p187 = scmp.lt.s32.totalorder %s19, 17
      %p188 = pnand %p186, %p187
      %p189 = pneg %p188
      // Predicated region
      $region9: #{batch_mhga_pallas.1} parent=5 // pred_check
        _
      $region10: #{batch_mhga_pallas.1} parent=5 // pred_check_branch
        %191 = sbr.rel (%p188) target = $region12
      $region11: #{batch_mhga_pallas.1} parent=5 // pred_region
        %s192 = ssub.s32 %s19, 1
      $region12: #{batch_mhga_pallas.1} parent=5 // pred_fallthru
        _
      %p193 = scmp.lt.s32.totalorder %s19, 16
      // Predicated region
      $region13: #{batch_mhga_pallas.1} parent=5 // pred_check
        %p194 = pneg %p193
      $region14: #{batch_mhga_pallas.1} parent=5 // pred_check_branch
        %196 = sbr.rel (%p194) target = $region16
      $region15: #{batch_mhga_pallas.1} parent=5 // pred_region
        // Predicated region
        $region17: #{batch_mhga_pallas.1} parent=15 // pred_check
          %p197 = pneg %p60
        $region18: #{batch_mhga_pallas.1} parent=15 // pred_check_branch
          %199 = sbr.rel (%p197) target = $region20
        $region19: #{batch_mhga_pallas.1} parent=15 // pred_region
          %s200 = sand.u32 %s50, 1
          %s201 = scalar_lea.sflag [#allocation3], %s200
          %s202 = sand.u32 %s50, 1
          %s203 = smul.addr %s202, 16
          %s204 = scalar_lea.vmem [#allocation2], %s203
          %206 = vsyncadd %s201, 0
          %s207 = smul.addr %s27, 2
          %s208 = smul.addr %s26, 8
          %s209 = sadd.s32 %s207, %s208
          %s210 = smul.addr %s209, 8
          %s211 = scalar_lea.hbm %s0, %s210
          %s212 = sshll.u32 %s211, 4
          %s213 = int_to_ptr.hbm [resolvable:$true] %s212
          %s214 = sshll.u32 %s204, 4
          %s215 = int_to_ptr.vmem [resolvable:$true] %s214
          %220 = dma.hbm_to_vmem [thread:$0]  %s213, 256, %s215, %s201, 128, 128, 8
        $region20: #{batch_mhga_pallas.1} parent=15 // pred_fallthru
          _
        // Predicated region
        $region21: #{batch_mhga_pallas.1} parent=15 // pred_check
          %p221 = pneg %p86
        $region22: #{batch_mhga_pallas.1} parent=15 // pred_check_branch
          %223 = sbr.rel (%p221) target = $region24
        $region23: #{batch_mhga_pallas.1} parent=15 // pred_region
          %p224 = scmp.lt.s32.totalorder %s26, 1
          %s225 = scalar_select %p224, %s26, 1
          %s226 = smul.addr %s225, 2
          %s227 = smul.addr %s226, 8
          %s228 = scalar_lea.vmem %s1, %s227
        $region24: #{batch_mhga_pallas.1} parent=15 // pred_fallthru
          _
        // Predicated region
        $region25: #{batch_mhga_pallas.1} parent=15 // pred_check
          %p229 = pneg %p114
        $region26: #{batch_mhga_pallas.1} parent=15 // pred_check_branch
          %231 = sbr.rel (%p229) target = $region28
        $region27: #{batch_mhga_pallas.1} parent=15 // pred_region
          %s232 = sand.u32 %s104, 1
          %s233 = scalar_lea.sflag [#allocation6], %s232
          %s234 = sand.u32 %s104, 1
          %s235 = smul.addr %s234, 16
          %s236 = scalar_lea.vmem [#allocation5], %s235
          %238 = vsyncadd %s233, 0
          %s239 = smul.addr %s28, 2
          %s240 = smul.addr %s27, 4
          %s241 = sadd.s32 %s239, %s240
          %s242 = smul.addr %s241, 8
          %s243 = scalar_lea.hbm %s2, %s242
          %s244 = sshll.u32 %s243, 4
          %s245 = int_to_ptr.hbm [resolvable:$true] %s244
          %s246 = sshll.u32 %s236, 4
          %s247 = int_to_ptr.vmem [resolvable:$true] %s246
          %252 = dma.hbm_to_vmem [thread:$0]  %s245, 256, %s247, %s233, 128, 128, 8
        $region28: #{batch_mhga_pallas.1} parent=15 // pred_fallthru
          _
        // Predicated region
        $region29: #{batch_mhga_pallas.1} parent=15 // pred_check
          %p253 = pneg %p142
        $region30: #{batch_mhga_pallas.1} parent=15 // pred_check_branch
          %255 = sbr.rel (%p253) target = $region32
        $region31: #{batch_mhga_pallas.1} parent=15 // pred_region
          %p256 = scmp.lt.s32.totalorder %s27, 3
          %s257 = scalar_select %p256, %s27, 3
          %p258 = scmp.lt.s32.totalorder %s28, 1
          %s259 = scalar_select %p258, %s28, 1
          %s260 = smul.addr %s257, 2
          %s261 = sadd.s32 %s259, %s260
          %s262 = smul.addr %s261, 2
          %s263 = scalar_lea.vmem %s3, %s262
        $region32: #{batch_mhga_pallas.1} parent=15 // pred_fallthru
          _
      $region16: #{batch_mhga_pallas.1} parent=5 // pred_fallthru
        _
      %p264 = scmp.le.s32.totalorder 1, %s19
      %p265 = scmp.lt.s32.totalorder %s19, 17
      %p266 = pnand %p264, %p265
      %p267 = pneg %p266
      // Predicated region
      $region33: #{batch_mhga_pallas.1} parent=5 // pred_check
        _
      $region34: #{batch_mhga_pallas.1} parent=5 // pred_check_branch
        %269 = sbr.rel (%p266) target = $region36
      $region35: #{batch_mhga_pallas.1} parent=5 // pred_region
        %s270 = ssub.s32 %s19, 1
        %s271 = sand.u32 %s53, 1
        %s272 = scalar_lea.sflag [#allocation3], %s271
        %s273 = sand.u32 %s53, 1
        %s274 = smul.addr %s273, 16
        %s275 = scalar_lea.vmem [#allocation2], %s274
        // Predicated region
        $region37: #{batch_mhga_pallas.1} parent=35 // pred_check
          %p276 = pneg %p66
        $region38: #{batch_mhga_pallas.1} parent=35 // pred_check_branch
          %278 = sbr.rel (%p276) target = $region40
        $region39: #{batch_mhga_pallas.1} parent=35 // pred_region
          %280 = dma.done %s272, 256
        $region40: #{batch_mhga_pallas.1} parent=35 // pred_fallthru
          _
        %s281 = sand.u32 %s107, 1
        %s282 = scalar_lea.sflag [#allocation6], %s281
        %s283 = sand.u32 %s107, 1
        %s284 = smul.addr %s283, 16
        %s285 = scalar_lea.vmem [#allocation5], %s284
        // Predicated region
        $region41: #{batch_mhga_pallas.1} parent=35 // pred_check
          %p286 = pneg %p120
        $region42: #{batch_mhga_pallas.1} parent=35 // pred_check_branch
          %288 = sbr.rel (%p286) target = $region44
        $region43: #{batch_mhga_pallas.1} parent=35 // pred_region
          %290 = dma.done %s282, 256
        $region44: #{batch_mhga_pallas.1} parent=35 // pred_fallthru
          _
        %s291 = sand.u32 %s53, 1
        %s292 = scalar_lea.sflag [#allocation3], %s291
        %s293 = sand.u32 %s53, 1
        %s294 = smul.addr %s293, 16
        %s295 = scalar_lea.vmem [#allocation2], %s294
        %p296 = pneg %p66
        %p297 = pneg %p63
        %p298 = scmp.lt.s32.totalorder %s29, 1
        %s299 = scalar_select %p298, %s29, 1
        %s300 = smul.addr %s299, 2
        %s301 = smul.addr %s300, 8
        %s302 = scalar_lea.vmem %s1, %s301
        %p303 = pneg %p92
        %p304 = pneg %p89
        %s305 = sand.u32 %s107, 1
        %s306 = scalar_lea.sflag [#allocation6], %s305
        %s307 = sand.u32 %s107, 1
        %s308 = smul.addr %s307, 16
        %s309 = scalar_lea.vmem [#allocation5], %s308
        %p310 = pneg %p120
        %p311 = pneg %p117
        %p312 = scmp.lt.s32.totalorder %s30, 3
        %s313 = scalar_select %p312, %s30, 3
        %p314 = scmp.lt.s32.totalorder %s31, 1
        %s315 = scalar_select %p314, %s31, 1
        %s316 = smul.addr %s313, 2
        %s317 = sadd.s32 %s315, %s316
        %s318 = smul.addr %s317, 2
        %s319 = scalar_lea.vmem %s3, %s318
        %p320 = pneg %p148
        %p321 = pneg %p145
        %p322 = pneg %p178
        %p323 = pneg %p175
        %s324 = sand.u32 %s165, 1
        %s325 = scalar_lea.sflag [#allocation4], %s324
        %s326 = sand.u32 %s165, 1
        %s327 = smul.addr %s326, 16
        %s328 = scalar_lea.vmem [#allocation7], %s327
        %p329 = scmp.lt.s32.totalorder %s29, 1
        %s330 = scalar_select %p329, %s29, 1
        %s331 = smul.addr %s330, 2
        %s332 = smul.addr %s331, 8
        %s333 = scalar_lea.vmem %s1, %s332
        %p334 = scmp.lt.s32.totalorder %s30, 3
        %s335 = scalar_select %p334, %s30, 3
        %p336 = scmp.lt.s32.totalorder %s31, 1
        %s337 = scalar_select %p336, %s31, 1
        %s338 = smul.addr %s335, 2
        %s339 = sadd.s32 %s337, %s338
        %s340 = smul.addr %s339, 2
        %s341 = scalar_lea.vmem %s3, %s340
        %v342 = vld [vmem:[%s275] sm:$0xff]
        %v343 = vld [vmem:[%s275 + $0x8] sm:$0xff]
        %v344 = vld [vmem:[%s285] sm:$0xff]
        %v345 = vld [vmem:[%s285 + $0x8] sm:$0xff]
        %v346 = vld [vmem:[%s341] sm:$0x1]
        %v347 = vld [vmem:[%s341 + $0x1] sm:$0x1]
        %v348 = vld [vmem:[%s333] sm:$0xff]
        %v349 = vld [vmem:[%s333 + $0x8] sm:$0xff]
        %vm350 = vcmask 130048
        %v352 = vsel %vm350, %v342, 0
        %v355 = vsel %vm350, %v343, 0
        %357 = vmatpush.msra.mxu0 0.0
        %358 = vmatpush.msra.mxu0 0.0
        %359 = vmatpush.msra.mxu0 0.0
        %360 = vmatpush.msra.mxu0 0.0
        %361 = vmatpush.msra.mxu0 0.0
        %362 = vmatpush.msra.mxu0 0.0
        %363 = vmatpush.msra.mxu0 0.0
        %364 = vmatpush.msra.mxu0 0.0
        %365 = vmatpush.msra.mxu0 0.0
        %366 = vmatpush.msra.mxu0 0.0
        %367 = vmatpush.msra.mxu0 0.0
        %368 = vmatpush.msra.mxu0 0.0
        %369 = vmatpush.msra.mxu0 0.0
        %370 = vmatpush.msra.mxu0 0.0
        %371 = vmatpush.msra.mxu0 %v345
        %372 = vmatpush.msra.mxu0 %v344
        %373 = vmatmul.f32.gmra.mxu0 %v352
        %v374 = vpop.f32.mrf.mxu0
        %v375 = vadd.f32 0.0, %v374
        %376 = vmatmul.f32.gmra.mxu0 %v355
        %v377 = vpop.f32.mrf.mxu0
        %v378 = vadd.f32 0.0, %v377
        %379 = vdwg.mxu0
        %v380 = vtanh.pop %v375
        %v381 = vtanh.pop %v378
        %v382 = vperm.slane %v346, 0
        %v383 = vmul.f32 %v380, %v382
        %v384 = vmul.f32 %v381, %v382
        %v385 = vsel %vm350, %v383, 0.0
        %386 = vadd.xlane.f32.xlu0 %v385
        %v387 = vpop.xlane.xlu0 %386
        %v388 = vsel %vm350, %v384, 0.0
        %389 = vadd.xlane.f32.xlu0 %v388
        %v390 = vpop.xlane.xlu0 %389
        %v392 = vsel %vm350, %v347, 0
        %v395 = vsel %vm350, %v380, 0
        %v398 = vsel %vm350, %v381, 0
        %400 = vmatpush.xpose.msra.mxu0 0.0
        %401 = vmatpush.xpose.msra.mxu0 0.0
        %402 = vmatpush.xpose.msra.mxu0 0.0
        %403 = vmatpush.xpose.msra.mxu0 0.0
        %404 = vmatpush.xpose.msra.mxu0 0.0
        %405 = vmatpush.xpose.msra.mxu0 0.0
        %406 = vmatpush.xpose.msra.mxu0 0.0
        %407 = vmatpush.xpose.msra.mxu0 0.0
        %408 = vmatpush.xpose.msra.mxu0 0.0
        %409 = vmatpush.xpose.msra.mxu0 0.0
        %410 = vmatpush.xpose.msra.mxu0 0.0
        %411 = vmatpush.xpose.msra.mxu0 0.0
        %412 = vmatpush.xpose.msra.mxu0 0.0
        %413 = vmatpush.xpose.msra.mxu0 0.0
        %414 = vmatpush.xpose.msra.mxu0 %v398
        %415 = vmatpush.xpose.msra.mxu0 %v395
        %416 = vmatmul.f32.gmra.mxu0 %v392
        %v417 = vpop.f32.mrf.mxu0
        %v418 = vadd.f32 0.0, %v417
        %419 = vdwg.mxu0
        %v420 = vperm.slane %v418, 0
        %v421 = vadd.f32 %v387, %v420
        %v422 = vadd.f32 %v390, %v420
        %vm423 = vcmp.ge.f32.partialorder %v421, 0.0
        %vm424 = vcmp.ge.f32.partialorder %v422, 0.0
        %v425 = vmul.f32 %v421, 0.2
        %v426 = vmul.f32 %v422, 0.2
        %v427 = vsel %vm423, %v421, %v425
        %v428 = vsel %vm424, %v422, %v426
        %v429 = vlaneseq
        %v430 = vshrl.u32 %v429, 7
        %v431 = vadd.s32 %v430, 8
        %v432 = vlaneseq
        %v433 = vand.u32 %v432, 127
        %vm434 = vcmp.eq.s32.totalorder %v430, %v433
        %vm435 = vcmp.eq.s32.totalorder %v431, %v433
        %v436 = vsel %vm434, 1, 0
        %v437 = vsel %vm435, 1, 0
        %v438 = vcvt.s32.f32 %v436
        %v439 = vcvt.s32.f32 %v437
        %v440 = vadd.f32 %v348, %v438
        %v441 = vadd.f32 %v349, %v439
        %vm442 = vcmp.eq.f32.partialorder %v440, 0.0
        %vm443 = vcmp.eq.f32.partialorder %v441, 0.0
        %v444 = vsel %vm442, -1e+12, %v427
        %v445 = vsel %vm443, -1e+12, %v428
        %v446 = vsel %vm350, %v444, -inf
        %447 = vmax.xlane.f32.xlu0 %v446
        %v448 = vpop.xlane.xlu0 %447
        %v449 = vsel %vm350, %v445, -inf
        %450 = vmax.xlane.f32.xlu0 %v449
        %v451 = vpop.xlane.xlu0 %450
        %v452 = vsub.f32 %v444, %v448
        %v453 = vsub.f32 %v445, %v451
        %v454 = vmul.f32 %v452, 1.442695
        %v455 = vpow.pop %v454
        %v456 = vmul.f32 %v453, 1.442695
        %v457 = vpow.pop %v456
        %v458 = vsel %vm350, %v455, 0.0
        %459 = vadd.xlane.f32.xlu0 %v458
        %v460 = vpop.xlane.xlu0 %459
        %v461 = vsel %vm350, %v457, 0.0
        %462 = vadd.xlane.f32.xlu0 %v461
        %v463 = vpop.xlane.xlu0 %462
        %v464 = vrcp.pop %v460
        %v465 = vmul.f32 %v460, %v464
        %v466 = vsub.f32 1.0, %v465
        %v467 = vmul.f32 %v464, %v466
        %v468 = vadd.f32 %v464, %v467
        %vm469 = vweird.f32 %v460
        %vm470 = vweird.f32 %v464
        %vm471 = vmor %vm469, %vm470
        %v472 = vsel %vm471, %v464, %v468
        %v473 = vand.u32 2147483647, %v460
        %vm474 = vcmp.eq.f32.partialorder %v473, 8.507059e+37
        %v475 = vand.u32 %v460, 2147483648
        %v476 = vor.u32 1.1754944e-38, %v475
        %v477 = vsel %vm474, %v476, %v472
        %v478 = vmul.f32 %v455, %v477
        %v479 = vrcp.pop %v463
        %v480 = vmul.f32 %v463, %v479
        %v481 = vsub.f32 1.0, %v480
        %v482 = vmul.f32 %v479, %v481
        %v483 = vadd.f32 %v479, %v482
        %vm484 = vweird.f32 %v463
        %vm485 = vweird.f32 %v479
        %vm486 = vmor %vm484, %vm485
        %v487 = vsel %vm486, %v479, %v483
        %v488 = vand.u32 2147483647, %v463
        %vm489 = vcmp.eq.f32.partialorder %v488, 8.507059e+37
        %v490 = vand.u32 %v463, 2147483648
        %v491 = vor.u32 1.1754944e-38, %v490
        %v492 = vsel %vm489, %v491, %v487
        %v493 = vmul.f32 %v457, %v492
        %v495 = vsel %vm350, %v478, 0
        %v498 = vsel %vm350, %v493, 0
        %500 = vmatpush.msra.mxu0 0.0
        %501 = vmatpush.msra.mxu0 0.0
        %502 = vmatpush.msra.mxu0 0.0
        %503 = vmatpush.msra.mxu0 0.0
        %504 = vmatpush.msra.mxu0 0.0
        %505 = vmatpush.msra.mxu0 0.0
        %506 = vmatpush.msra.mxu0 0.0
        %507 = vmatpush.msra.mxu0 0.0
        %508 = vmatpush.msra.mxu0 0.0
        %509 = vmatpush.msra.mxu0 0.0
        %510 = vmatpush.msra.mxu0 0.0
        %511 = vmatpush.msra.mxu0 0.0
        %512 = vmatpush.msra.mxu0 0.0
        %513 = vmatpush.msra.mxu0 0.0
        %514 = vmatpush.msra.mxu0 %v378
        %515 = vmatpush.msra.mxu0 %v375
        %516 = vmatmul.f32.gmra.mxu0 %v495
        %v517 = vpop.f32.mrf.mxu0
        %v518 = vadd.f32 0.0, %v517
        %519 = vmatmul.f32.gmra.mxu0 %v498
        %v520 = vpop.f32.mrf.mxu0
        %v521 = vadd.f32 0.0, %v520
        %522 = vdwg.mxu0
        %523 = vst.msk [vmem:[%s328] sm:$0xff] %vm350, %v518
        %524 = vst.msk [vmem:[%s328 + $0x8] sm:$0xff] %vm350, %v521
        %s525 = sand.u32 %s165, 1
        %s526 = scalar_lea.sflag [#allocation4], %s525
        %s527 = sand.u32 %s165, 1
        %s528 = smul.addr %s527, 16
        %s529 = scalar_lea.vmem [#allocation7], %s528
        // Predicated region
        $region45: #{batch_mhga_pallas.1} parent=35 // pred_check
          %p530 = pneg %p175
        $region46: #{batch_mhga_pallas.1} parent=35 // pred_check_branch
          %532 = sbr.rel (%p530) target = $region48
        $region47: #{batch_mhga_pallas.1} parent=35 // pred_region
          %534 = vsyncadd %s526, 0
          %s535 = smul.addr %s31, 2
          %s536 = smul.addr %s30, 4
          %s537 = sadd.s32 %s535, %s536
          %s538 = smul.addr %s29, 16
          %s539 = sadd.s32 %s537, %s538
          %s540 = smul.addr %s539, 8
          %s541 = scalar_lea.hbm %s4, %s540
          %s542 = sshll.u32 %s529, 4
          %s543 = int_to_ptr.vmem [resolvable:$true] %s542
          %s544 = sshll.u32 %s541, 4
          %s545 = int_to_ptr.hbm [resolvable:$true] %s544
          %550 = dma.vmem_to_hbm [thread:$0]  %s543, 256, %s545, %s526, 128, 128, 8
        $region48: #{batch_mhga_pallas.1} parent=35 // pred_fallthru
          _
      $region36: #{batch_mhga_pallas.1} parent=5 // pred_fallthru
        _
      %p551 = scmp.le.s32.totalorder 2, %s19
      // Predicated region
      $region49: #{batch_mhga_pallas.1} parent=5 // pred_check
        %p552 = pneg %p551
      $region50: #{batch_mhga_pallas.1} parent=5 // pred_check_branch
        %554 = sbr.rel (%p552) target = $region52
      $region51: #{batch_mhga_pallas.1} parent=5 // pred_region
        %s555 = ssub.s32 %s19, 2
        // Predicated region
        $region53: #{batch_mhga_pallas.1} parent=51 // pred_check
          %p556 = pneg %p181
        $region54: #{batch_mhga_pallas.1} parent=51 // pred_check_branch
          %558 = sbr.rel (%p556) target = $region56
        $region55: #{batch_mhga_pallas.1} parent=51 // pred_region
          %s559 = sand.u32 %s166, 1
          %s560 = scalar_lea.sflag [#allocation4], %s559
          %s561 = sand.u32 %s166, 1
          %s562 = smul.addr %s561, 16
          %s563 = scalar_lea.vmem [#allocation7], %s562
          %565 = dma.done %s560, 256
        $region56: #{batch_mhga_pallas.1} parent=51 // pred_fallthru
          _
      $region52: #{batch_mhga_pallas.1} parent=5 // pred_fallthru
        _
    $region6: #{batch_mhga_pallas.1} parent=1 // loop_footer
      %s23 = sadd.s32 1, %s19
    $region7: #{batch_mhga_pallas.1} parent=1 // loop_footer_branch
      %18 = sbr.rel target = $region3
    $region8: #{batch_mhga_pallas.1} parent=1 // loop_exit
      _
    %566 = vsyncpa [#allocation3], 1
    %s567 = scalar_lea.sflag [#allocation3], 1
    %568 = vsyncpa %s567, 1
    %569 = vsyncpa [#allocation6], 1
    %s570 = scalar_lea.sflag [#allocation6], 1
    %571 = vsyncpa %s570, 1
    %572 = vsyncpa [#allocation4], 1
    %s573 = scalar_lea.sflag [#allocation4], 1
    %574 = vsyncpa %s573, 1

</llo_original>
